<compile_context>
chip_gen: v5e
topology: v5e:2x2
jax: 0.10.0
libtpu: 0.0.40
codegen_flags: <defaults>
</compile_context>

<pallas_src>
import functools

import jax
import jax.numpy as jnp
from jax.experimental import pallas as pl
from jax.experimental.pallas import tpu as pltpu

LANE = 128     # TPU lane width
SUBLANE = 8    # sublane granularity -> row alignment inside the packed slab


def _round_up(x, m):
    return (x + m - 1) // m * m


# ----------------------------------------------------------------------------
# Parameter packing: w1 (dim_state, hidden), b1 (hidden,), w2 (hidden, dim_act),
# b2 (dim_act,)  ->  one (rows, 128) f32 slab.  Every region is zero-padded to
# the full 128 lanes (and the w2 region to 128 rows) so all in-kernel reads are
# full-width, sublane-aligned views and padded output lanes are exactly zero.
# ----------------------------------------------------------------------------
def pack_params(w1, b1, w2, b2):
    dim_state, hidden = w1.shape
    dim_act = w2.shape[1]
    assert hidden <= LANE and dim_act <= LANE, "dummy actor sizes only"

    b1_off = _round_up(dim_state, SUBLANE)
    w2_off = b1_off + SUBLANE
    b2_off = w2_off + LANE            # w2 region holds a full 128 rows
    n_rows = b2_off + SUBLANE

    slab = jnp.zeros((n_rows, LANE), jnp.float32)
    slab = slab.at[0:dim_state, 0:hidden].set(w1.astype(jnp.float32))
    slab = slab.at[b1_off, 0:hidden].set(jnp.ravel(b1).astype(jnp.float32))
    slab = slab.at[w2_off:w2_off + hidden, 0:dim_act].set(w2.astype(jnp.float32))
    slab = slab.at[b2_off, 0:dim_act].set(jnp.ravel(b2).astype(jnp.float32))

    meta = dict(dim_state=dim_state, hidden=hidden, dim_act=dim_act,
                b1_off=b1_off, w2_off=w2_off, b2_off=b2_off)
    return slab, meta


# ----------------------------------------------------------------------------
# Kernel: one batch tile of the 2-layer MLP.  Weights arrive as one VMEM slab;
# every weight read below is a full-lane (.., 128) view of that slab.
# ----------------------------------------------------------------------------
def _actor_mlp_kernel(x_ref, p_ref, out_ref, *, dim_state, b1_off, w2_off, b2_off):
    x = x_ref[...]                              # (tile_b, dim_state)
    w1 = p_ref[0:dim_state, :]                  # (dim_state, 128), cols>=hidden are 0
    b1 = p_ref[b1_off:b1_off + 1, :]            # (1, 128),         cols>=hidden are 0
    w2 = p_ref[w2_off:w2_off + LANE, :]         # (128, 128),  pad rows/cols are 0
    b2 = p_ref[b2_off:b2_off + 1, :]            # (1, 128),         cols>=dim_act are 0

    # Default MXU precision (review: HIGHEST was 3-6x MXU passes on v5e for no
    # benefit at these sizes); accumulate in f32.
    h = jnp.maximum(
        jnp.dot(x, w1, preferred_element_type=jnp.float32) + b1, 0.0)
    y = jnp.dot(h, w2, preferred_element_type=jnp.float32) + b2

    # out_ref is either (tile_b, 128) lane-dense (small batch) or
    # (tile_b, dim_act) narrow (large batch, to cut HBM writeback).
    out_w = out_ref.shape[-1]
    out_ref[...] = y[:, :out_w].astype(out_ref.dtype)


# ----------------------------------------------------------------------------
# Wrapper: batch-tiled pallas_call.
# ----------------------------------------------------------------------------
def actor_mlp(x, slab, meta, *, max_tile_b=2048, narrow_out_threshold=1024):
    batch, dim_state = x.shape
    assert dim_state == meta["dim_state"]
    dim_act = meta["dim_act"]
    n_rows = slab.shape[0]

    # Big batch tiles (2048 rows ~= 2.5 MB double-buffered, far under VMEM
    # limits on every generation); ragged last block handled by Pallas, so no
    # jnp.pad of x is needed.
    tile_b = min(_round_up(batch, SUBLANE), max_tile_b)
    if batch > 1024:
        # Keep >= 2 grid steps so ("parallel",) can shard across v7x's two
        # TensorCores; harmless on v5e/v6e (single TC).
        tile_b = min(tile_b, _round_up(pl.cdiv(batch, 2), SUBLANE))
    grid = (pl.cdiv(batch, tile_b),)

    # Small batch: lane-dense (tile_b, 128) store (launch overhead dominates).
    # Large batch: narrow (tile_b, dim_act) output so HBM writeback is not
    # inflated 128/dim_act-fold.
    narrow_out = batch >= narrow_out_threshold
    out_w = dim_act if narrow_out else LANE

    kernel = functools.partial(
        _actor_mlp_kernel,
        dim_state=dim_state,
        b1_off=meta["b1_off"], w2_off=meta["w2_off"], b2_off=meta["b2_off"])

    flops = 2 * batch * (dim_state * LANE + LANE * LANE)
    bytes_accessed = 4 * (batch * dim_state + slab.size + batch * out_w)

    out = pl.pallas_call(
        kernel,
        out_shape=jax.ShapeDtypeStruct((batch, out_w), jnp.float32),
        grid=grid,
        in_specs=[
            pl.BlockSpec((tile_b, dim_state), lambda i: (i, 0)),
            pl.BlockSpec((n_rows, LANE), lambda i: (0, 0)),   # weights stay resident
        ],
        out_specs=pl.BlockSpec((tile_b, out_w), lambda i: (i, 0)),
        compiler_params=pltpu.CompilerParams(
            dimension_semantics=("parallel",)),
        cost_estimate=pl.CostEstimate(
            flops=flops, transcendentals=0, bytes_accessed=bytes_accessed),
    )(x, slab)

    return out if narrow_out else out[:, :dim_act]


def dummy_actor_model_forward(x, params, is_training=False):
    """Pallas equivalent of DummyActorModel.forward: Linear -> ReLU -> Linear."""
    return actor_mlp(x, params["slab"], params["meta"])


# ----------------------------------------------------------------------------
# Demo / self-check
# ----------------------------------------------------------------------------
if __name__ == "__main__":
    dim_state, dim_act, batch, hidden = 16, 4, 8, 64

    key = jax.random.PRNGKey(0)
    kx, k1, k2, k3, k4 = jax.random.split(key, 5)
    x = jax.random.normal(kx, (batch, dim_state), dtype=jnp.float32)

    # PyTorch-style uniform(+/- 1/sqrt(fan_in)) init.
    bound1 = 1.0 / float(dim_state) ** 0.5
    bound2 = 1.0 / float(hidden) ** 0.5
    w1 = jax.random.uniform(k1, (dim_state, hidden), jnp.float32, -bound1, bound1)
    b1 = jax.random.uniform(k2, (hidden,), jnp.float32, -bound1, bound1)
    w2 = jax.random.uniform(k3, (hidden, dim_act), jnp.float32, -bound2, bound2)
    b2 = jax.random.uniform(k4, (dim_act,), jnp.float32, -bound2, bound2)

    slab, meta = pack_params(w1, b1, w2, b2)
    params = {"slab": slab, "meta": meta}

    out = dummy_actor_model_forward(x, params)
    out = jax.block_until_ready(out)

    # Plain-JAX reference of the same MLP.  Tolerance relaxed because the
    # kernel now uses default (bf16-pass) MXU precision instead of HIGHEST.
    ref = jnp.maximum(x @ w1 + b1, 0.0) @ w2 + b2
    assert out.shape == (batch, dim_act)
    assert jnp.allclose(out, ref, atol=2e-2), float(jnp.max(jnp.abs(out - ref)))

    print("KERNEL_OK")
</pallas_src>

<mosaic_0001>
module attributes {stable_mosaic.version = 11 : i64} {
  func.func @_actor_mlp_kernel(%arg0: i32, %arg1: memref<8x16xf32, #tpu.memory_space<vmem>>, %arg2: memref<160x128xf32, #tpu.memory_space<vmem>>, %arg3: memref<8x128xf32, #tpu.memory_space<vmem>>) attributes {dimension_semantics = [#tpu.dimension_semantics<parallel>], iteration_bounds = array<i64: 1>, scalar_prefetch = 0 : i64, scratch_operands = 0 : i64, tpu.core_type = #tpu.core_type<tc>, window_params = [{transform_indices = @transform_0, window_bounds = array<i64: 8, 16>}, {pipeline_mode = #tpu.pipeline_mode<synchronous>, transform_indices = @transform_1, window_bounds = array<i64: 160, 128>}, {transform_indices = @transform_2, window_bounds = array<i64: 8, 128>}]} {
    %c0 = arith.constant 0 : index
    %c0_0 = arith.constant 0 : index
    %0 = vector.load %arg1[%c0, %c0_0] : memref<8x16xf32, #tpu.memory_space<vmem>>, vector<8x16xf32>
    %c0_1 = arith.constant 0 : index
    %c0_2 = arith.constant 0 : index
    %1 = vector.load %arg2[%c0_1, %c0_2] : memref<160x128xf32, #tpu.memory_space<vmem>>, vector<16x128xf32>
    %c16 = arith.constant 16 : index
    %c0_3 = arith.constant 0 : index
    %2 = vector.load %arg2[%c16, %c0_3] : memref<160x128xf32, #tpu.memory_space<vmem>>, vector<1x128xf32>
    %c24 = arith.constant 24 : index
    %c0_4 = arith.constant 0 : index
    %3 = vector.load %arg2[%c24, %c0_4] : memref<160x128xf32, #tpu.memory_space<vmem>>, vector<128x128xf32>
    %c152 = arith.constant 152 : index
    %c0_5 = arith.constant 0 : index
    %4 = vector.load %arg2[%c152, %c0_5] : memref<160x128xf32, #tpu.memory_space<vmem>>, vector<1x128xf32>
    %cst = arith.constant dense<0.000000e+00> : vector<8x128xf32>
    %5 = tpu.matmul %0, %1, %cst {dimension_numbers = #tpu.dot_dimension_numbers<[1], [0], [0], [1], [0, 0, 1, 1], [], []>} : vector<8x16xf32>, vector<16x128xf32>, vector<8x128xf32> -> vector<8x128xf32>
    %6 = vector.broadcast %2 : vector<1x128xf32> to vector<8x128xf32>
    %7 = arith.addf %5, %6 : vector<8x128xf32>
    %cst_6 = arith.constant 0.000000e+00 : f32
    %8 = vector.broadcast %cst_6 : f32 to vector<8x128xf32>
    %9 = arith.maximumf %7, %8 : vector<8x128xf32>
    %cst_7 = arith.constant dense<0.000000e+00> : vector<8x128xf32>
    %10 = tpu.matmul %9, %3, %cst_7 {dimension_numbers = #tpu.dot_dimension_numbers<[1], [0], [0], [1], [0, 0, 1, 1], [], []>} : vector<8x128xf32>, vector<128x128xf32>, vector<8x128xf32> -> vector<8x128xf32>
    %11 = vector.broadcast %4 : vector<1x128xf32> to vector<8x128xf32>
    %12 = arith.addf %10, %11 : vector<8x128xf32>
    %c0_8 = arith.constant 0 : index
    %c0_9 = arith.constant 0 : index
    %13 = vector.load %arg3[%c0_8, %c0_9] : memref<8x128xf32, #tpu.memory_space<vmem>>, vector<8x128xf32>
    tpu.vector_store %arg3[%c0_8, %c0_9], %12 {strides = array<i32>} : memref<8x128xf32, #tpu.memory_space<vmem>>, vector<8x128xf32>,
    return
  }
  func.func @transform_0(%arg0: i32) -> (i32, i32) {
    %c0_i32 = arith.constant 0 : i32
    %c0_i32_0 = arith.constant 0 : i32
    return %arg0, %c0_i32 : i32, i32
  }
  func.func @transform_1(%arg0: i32) -> (i32, i32) {
    %c0_i32 = arith.constant 0 : i32
    %c0_i32_0 = arith.constant 0 : i32
    %c0_i32_1 = arith.constant 0 : i32
    return %c0_i32, %c0_i32_0 : i32, i32
  }
  func.func @transform_2(%arg0: i32) -> (i32, i32) {
    %c0_i32 = arith.constant 0 : i32
    %c0_i32_0 = arith.constant 0 : i32
    return %arg0, %c0_i32 : i32, i32
  }
}

</mosaic_0001>

<llo_original>
// kernel: tpu_custom_call.1
$region0: #{tpu_custom_call.1}
  #allocation0 [shape = 'u32[]', space=smem, size = 0x4, offset = 0x4, fixed_abs, tag = 'smem constant byte address 0x4 - core index']
  #allocation1 [shape = 'u32[72,128]{1,0:T(1,128)}', space=vmem, size = 0x9000, scoped, tag = 'internal scratch']
  %s0 = inlined_call_operand.hbm [shape: f32[8,16], index: 0, kind: input, shape index: {}]
  %s1 = inlined_call_operand.hbm [shape: f32[160,128], index: 1, kind: input, shape index: {}]
  %s2 = inlined_call_operand.hbm [shape: f32[8,128], index: 2, kind: output, shape index: {}]
  %s3 = sld [smem:[#allocation0]]
  $region26: #{tpu_custom_call.1} parent=0
    _
  %s5 = ssub.s32 1, %s3
  %s6 = scalar_select 0, %s5, %s3
  $region1: #{tpu_custom_call.1} parent=0
    #allocation2 [shape = 'u8[4096]{0}', space=vmem, size = 0x1000, scoped, tag = 'input window, operand 0, single buffered']
    #allocation3 [shape = 's32[1]{0}', space=sflag, size = 0x4, scoped, tag = 'scoped memory for tpu_custom_call.1']
    #allocation4 [shape = 's32[1]{0}', space=sflag, size = 0x4, scoped, tag = 'scoped memory for tpu_custom_call.1']
    #allocation5 [shape = 'u8[81920]{0}', space=vmem, size = 0x14000, scoped, tag = 'input window, operand 1, single buffered']
    #allocation6 [shape = 's32[1]{0}', space=sflag, size = 0x4, scoped, tag = 'scoped memory for tpu_custom_call.1']
    #allocation7 [shape = 'u8[4096]{0}', space=vmem, size = 0x1000, scoped, tag = 'output window, operand 0, single buffered']
    %7 = vsyncpa [#allocation3], 0
    %8 = vsyncpa [#allocation6], 0
    %9 = vsyncpa [#allocation4], 0
    // Predicated region
    $region2: #{tpu_custom_call.1} parent=1 // pred_check
      _
    $region3: #{tpu_custom_call.1} parent=1 // pred_check_branch
      %11 = sbr.rel (0) target = $region5
    $region4: #{tpu_custom_call.1} parent=1 // pred_region
      %13 = vsyncadd [#allocation3], 0
      %s15 = sshll.u32 %s0, 4
      %s16 = int_to_ptr.hbm [resolvable:$true] %s15
      %s17 = sshll.u32 [#allocation2], 4
      %s18 = int_to_ptr.vmem [resolvable:$true] %s17
      %20 = dma.hbm_to_vmem [thread:$0]  %s16, 128, %s18, [#allocation3]
    $region5: #{tpu_custom_call.1} parent=1 // pred_fallthru
      _
    // Predicated region
    $region6: #{tpu_custom_call.1} parent=1 // pred_check
      _
    $region7: #{tpu_custom_call.1} parent=1 // pred_check_branch
      %22 = sbr.rel (0) target = $region9
    $region8: #{tpu_custom_call.1} parent=1 // pred_region
      %24 = vsyncadd [#allocation6], 0
      %s25 = sshll.u32 %s1, 4
      %s26 = int_to_ptr.hbm [resolvable:$true] %s25
      %s27 = sshll.u32 [#allocation5], 4
      %s28 = int_to_ptr.vmem [resolvable:$true] %s27
      %33 = dma.hbm_to_vmem [thread:$0]  %s26, 2560, %s28, [#allocation6], 128, 128, 8
    $region9: #{tpu_custom_call.1} parent=1 // pred_fallthru
      _
    // Predicated region
    $region10: #{tpu_custom_call.1} parent=1 // pred_check
      _
    $region11: #{tpu_custom_call.1} parent=1 // pred_check_branch
      %35 = sbr.rel (0) target = $region13
    $region12: #{tpu_custom_call.1} parent=1 // pred_region
      %37 = dma.done [#allocation3], 128
    $region13: #{tpu_custom_call.1} parent=1 // pred_fallthru
      _
    // Predicated region
    $region14: #{tpu_custom_call.1} parent=1 // pred_check
      _
    $region15: #{tpu_custom_call.1} parent=1 // pred_check_branch
      %39 = sbr.rel (0) target = $region17
    $region16: #{tpu_custom_call.1} parent=1 // pred_region
      %41 = dma.done [#allocation6], 2560
    $region17: #{tpu_custom_call.1} parent=1 // pred_fallthru
      _
    %v42 = vld [vmem:[#allocation2] sm:$0xff]
    %v43 = vld [vmem:[#allocation5] sm:$0xff]
    %v44 = vld [vmem:[#allocation5 + $0x8] sm:$0xff]
    %v45 = vld [vmem:[#allocation5 + $0x10] sm:$0x1]
    %v46 = vld [vmem:[#allocation5 + $0x18] sm:$0xff]
    %v47 = vld [vmem:[#allocation5 + $0x20] sm:$0xff]
    %v48 = vld [vmem:[#allocation5 + $0x28] sm:$0xff]
    %v49 = vld [vmem:[#allocation5 + $0x30] sm:$0xff]
    %v50 = vld [vmem:[#allocation5 + $0x38] sm:$0xff]
    %v51 = vld [vmem:[#allocation5 + $0x40] sm:$0xff]
    %v52 = vld [vmem:[#allocation5 + $0x48] sm:$0xff]
    %v53 = vld [vmem:[#allocation5 + $0x50] sm:$0xff]
    %v54 = vld [vmem:[#allocation5 + $0x58] sm:$0xff]
    %v55 = vld [vmem:[#allocation5 + $0x60] sm:$0xff]
    %v56 = vld [vmem:[#allocation5 + $0x68] sm:$0xff]
    %v57 = vld [vmem:[#allocation5 + $0x70] sm:$0xff]
    %v58 = vld [vmem:[#allocation5 + $0x78] sm:$0xff]
    %v59 = vld [vmem:[#allocation5 + $0x80] sm:$0xff]
    %v60 = vld [vmem:[#allocation5 + $0x88] sm:$0xff]
    %v61 = vld [vmem:[#allocation5 + $0x90] sm:$0xff]
    %v62 = vld [vmem:[#allocation5 + $0x98] sm:$0x1]
    %v63 = vperm.slane %v45, 0
    %vm64 = vcmask 130048
    %v66 = vsel %vm64, %v42, 0
    %68 = vmatpush.msra.mxu0 0.0
    %69 = vmatpush.msra.mxu0 0.0
    %70 = vmatpush.msra.mxu0 0.0
    %71 = vmatpush.msra.mxu0 0.0
    %72 = vmatpush.msra.mxu0 0.0
    %73 = vmatpush.msra.mxu0 0.0
    %74 = vmatpush.msra.mxu0 0.0
    %75 = vmatpush.msra.mxu0 0.0
    %76 = vmatpush.msra.mxu0 0.0
    %77 = vmatpush.msra.mxu0 0.0
    %78 = vmatpush.msra.mxu0 0.0
    %79 = vmatpush.msra.mxu0 0.0
    %80 = vmatpush.msra.mxu0 0.0
    %81 = vmatpush.msra.mxu0 0.0
    %82 = vmatpush.msra.mxu0 %v44
    %83 = vmatpush.msra.mxu0 %v43
    %84 = vmatmul.f32.gmra.mxu0 %v66
    %v85 = vpop.f32.mrf.mxu0
    %v86 = vadd.f32 %v63, %v85
    %87 = vdwg.mxu0
    %v88 = vmax.f32 %v86, 0.0
    %v89 = vperm.slane %v62, 0
    %90 = vmatpush.msra.mxu0 %v61
    %91 = vmatpush.msra.mxu0 %v60
    %92 = vmatpush.msra.mxu0 %v59
    %93 = vmatpush.msra.mxu0 %v58
    %94 = vmatpush.msra.mxu0 %v57
    %95 = vmatpush.msra.mxu0 %v56
    %96 = vmatpush.msra.mxu0 %v55
    %97 = vmatpush.msra.mxu0 %v54
    %98 = vmatpush.msra.mxu0 %v53
    %99 = vmatpush.msra.mxu0 %v52
    %100 = vmatpush.msra.mxu0 %v51
    %101 = vmatpush.msra.mxu0 %v50
    %102 = vmatpush.msra.mxu0 %v49
    %103 = vmatpush.msra.mxu0 %v48
    %104 = vmatpush.msra.mxu0 %v47
    %105 = vmatpush.msra.mxu0 %v46
    %106 = vmatmul.f32.gmra.mxu0 %v88
    %v107 = vpop.f32.mrf.mxu0
    %v108 = vadd.f32 %v89, %v107
    %109 = vdwg.mxu0
    %110 = vst [vmem:[#allocation7] sm:$0xff] %v108
    // Predicated region
    $region18: #{tpu_custom_call.1} parent=1 // pred_check
      _
    $region19: #{tpu_custom_call.1} parent=1 // pred_check_branch
      %112 = sbr.rel (0) target = $region21
    $region20: #{tpu_custom_call.1} parent=1 // pred_region
      %114 = vsyncadd [#allocation4], 0
      %s116 = sshll.u32 [#allocation7], 4
      %s117 = int_to_ptr.vmem [resolvable:$true] %s116
      %s118 = sshll.u32 %s2, 4
      %s119 = int_to_ptr.hbm [resolvable:$true] %s118
      %121 = dma.vmem_to_hbm [thread:$0]  %s117, 128, %s119, [#allocation4]
    $region21: #{tpu_custom_call.1} parent=1 // pred_fallthru
      _
    // Predicated region
    $region22: #{tpu_custom_call.1} parent=1 // pred_check
      _
    $region23: #{tpu_custom_call.1} parent=1 // pred_check_branch
      %123 = sbr.rel (0) target = $region25
    $region24: #{tpu_custom_call.1} parent=1 // pred_region
      %125 = dma.done [#allocation4], 128
    $region25: #{tpu_custom_call.1} parent=1 // pred_fallthru
      _
    %126 = vsyncpa [#allocation3], 1
    %127 = vsyncpa [#allocation6], 1
    %128 = vsyncpa [#allocation4], 1

</llo_original>
